<compile_context>
chip_gen: v7x
topology: tpu7x:2x2x1
jax: 0.10.0
libtpu: 0.0.40
codegen_flags: <defaults>
</compile_context>

<pallas_src>
import math
from functools import partial

import jax
import jax.numpy as jnp
from jax import lax
from jax.experimental import pallas as pl
from jax.experimental.pallas import tpu as pltpu


# ----------------------------------------------------------------------------
# Pallas kernel: one batch element's full [T, d_model] slab per grid step.
# ----------------------------------------------------------------------------
def posconvff_kernel(*refs, pad, eps, has_mask):
    if has_mask:
        (x_ref, g_ref, beta_ref, w1_ref, b1_ref, w2_ref, b2_ref,
         mask_ref, o_ref) = refs
    else:
        (x_ref, g_ref, beta_ref, w1_ref, b1_ref, w2_ref, b2_ref,
         o_ref) = refs
        mask_ref = None

    x = x_ref[0].astype(jnp.float32)                      # (T, D)
    T, D = x.shape
    k = w1_ref.shape[0]
    d_inner = w1_ref.shape[2]

    # ---- LayerNorm over d_model (torch default eps, biased variance) -------
    mu = jnp.mean(x, axis=-1, keepdims=True)
    var = jnp.mean((x - mu) ** 2, axis=-1, keepdims=True)
    ln = (x - mu) * lax.rsqrt(var + eps)
    ln = ln * g_ref[...] + beta_ref[...]                  # (1, D) broadcasts

    # ---- Conv1d(d_model -> d_inner), 'same' zero padding, then ReLU --------
    if pad > 0:
        zp = jnp.zeros((pad, D), jnp.float32)
        ln_p = jnp.concatenate([zp, ln, zp], axis=0)      # (T + 2*pad, D)
    else:
        ln_p = ln
    h = jnp.zeros((T, d_inner), jnp.float32)
    for j in range(k):                                    # static unrolled taps
        h = h + jnp.dot(ln_p[j:j + T, :], w1_ref[j],
                        preferred_element_type=jnp.float32)
    h = jnp.maximum(h + b1_ref[...], 0.0)

    # ---- Conv1d(d_inner -> d_model), 'same' zero padding -------------------
    if pad > 0:
        zp2 = jnp.zeros((pad, d_inner), jnp.float32)
        h_p = jnp.concatenate([zp2, h, zp2], axis=0)      # (T + 2*pad, d_inner)
    else:
        h_p = h
    y = jnp.zeros((T, D), jnp.float32)
    for j in range(k):
        y = y + jnp.dot(h_p[j:j + T, :], w2_ref[j],
                        preferred_element_type=jnp.float32)
    y = y + b2_ref[...]

    # ---- Dropout (precomputed keep/scale mask; identity in eval) -----------
    if mask_ref is not None:
        y = y * mask_ref[0]

    # ---- Residual add -------------------------------------------------------
    o_ref[0] = (y + x).astype(o_ref.dtype)


# ----------------------------------------------------------------------------
# Wrapper
# ----------------------------------------------------------------------------
def pos_conv_ff_forward(x, gamma, beta, w1, b1, w2, b2, *,
                        dropout_p: float = 0.1, training: bool = False,
                        rng=None, eps: float = 1e-5):
    """PosConvFF forward.

    x:  (B, T, d_model)
    w1: (k, d_model, d_inner)   -- torch conv1 weight (d_inner, d_model, k)
                                   pre-transposed to per-tap matmul layout
    w2: (k, d_inner, d_model)
    """
    B, T, D = x.shape
    k, _, d_inner = w1.shape
    pad = (k - 1) // 2          # get_same_padding for odd kernel_size

    gamma2 = gamma.reshape(1, D).astype(jnp.float32)
    beta2 = beta.reshape(1, D).astype(jnp.float32)
    b1_2 = b1.reshape(1, d_inner).astype(jnp.float32)
    b2_2 = b2.reshape(1, D).astype(jnp.float32)

    has_mask = bool(training) and dropout_p > 0.0
    inputs = [x, gamma2, beta2, w1, b1_2, w2, b2_2]
    in_specs = [
        pl.BlockSpec((1, T, D), lambda b: (b, 0, 0)),          # x
        pl.BlockSpec((1, D), lambda b: (0, 0)),                # gamma
        pl.BlockSpec((1, D), lambda b: (0, 0)),                # beta
        pl.BlockSpec((k, D, d_inner), lambda b: (0, 0, 0)),    # w1 (whole)
        pl.BlockSpec((1, d_inner), lambda b: (0, 0)),          # b1
        pl.BlockSpec((k, d_inner, D), lambda b: (0, 0, 0)),    # w2 (whole)
        pl.BlockSpec((1, D), lambda b: (0, 0)),                # b2
    ]
    if has_mask:
        # TODO(synk): mask uses jax.random (counter-based) in the wrapper, not
        # torch's RNG stream nor the TPU hardware PRNG; semantics (drop prob p,
        # scale survivors by 1/(1-p)) match nn.Dropout.  p >= 1 drops all.
        if rng is None:
            rng = jax.random.PRNGKey(0)
        if dropout_p >= 1.0:
            mask = jnp.zeros((B, T, D), jnp.float32)
        else:
            keep = jax.random.bernoulli(rng, 1.0 - dropout_p, (B, T, D))
            mask = keep.astype(jnp.float32) * (1.0 / (1.0 - dropout_p))
        inputs.append(mask)
        in_specs.append(pl.BlockSpec((1, T, D), lambda b: (b, 0, 0)))

    kernel = partial(posconvff_kernel, pad=pad, eps=eps, has_mask=has_mask)

    # TODO(synk): for long sequences, additionally tile the time axis (with a
    # `pad`-wide halo per conv) so each x/out block stays in the 1-4 MiB range.
    return pl.pallas_call(
        kernel,
        out_shape=jax.ShapeDtypeStruct((B, T, D), x.dtype),
        grid_spec=pltpu.PrefetchScalarGridSpec(
            num_scalar_prefetch=0,
            grid=(B,),
            in_specs=in_specs,
            out_specs=pl.BlockSpec((1, T, D), lambda b: (b, 0, 0)),
        ),
        compiler_params=pltpu.CompilerParams(
            dimension_semantics=("parallel",),
        ),
    )(*inputs)


# ----------------------------------------------------------------------------
# Pure-JAX reference (torch-layout weights) for correctness checking.
# ----------------------------------------------------------------------------
def ref_forward(x, gamma, beta, w1_t, b1, w2_t, b2, *, pad, eps=1e-5):
    mu = x.mean(-1, keepdims=True)
    var = ((x - mu) ** 2).mean(-1, keepdims=True)
    ln = (x - mu) / jnp.sqrt(var + eps) * gamma + beta
    xc = jnp.transpose(ln, (0, 2, 1))                       # (B, D, T)
    h = lax.conv_general_dilated(
        xc, w1_t, (1,), [(pad, pad)],
        dimension_numbers=("NCH", "OIH", "NCH"),
        precision=lax.Precision.HIGHEST)
    h = jnp.maximum(h + b1[None, :, None], 0.0)
    y = lax.conv_general_dilated(
        h, w2_t, (1,), [(pad, pad)],
        dimension_numbers=("NCH", "OIH", "NCH"),
        precision=lax.Precision.HIGHEST)
    y = y + b2[None, :, None]
    return jnp.transpose(y, (0, 2, 1)) + x


# ----------------------------------------------------------------------------
# Demo / correctness check
# ----------------------------------------------------------------------------
if __name__ == "__main__":
    B, T, D, D_INNER, K = 2, 16, 128, 256, 3   # lane-dense d_model (mult of 128)
    PAD = (K - 1) // 2

    root = jax.random.PRNGKey(0)
    kx, kg, kb, kw1, kb1, kw2, kb2, kdrop = jax.random.split(root, 8)

    x = jax.random.normal(kx, (B, T, D), jnp.float32)
    gamma = 1.0 + 0.1 * jax.random.normal(kg, (D,), jnp.float32)
    beta = 0.1 * jax.random.normal(kb, (D,), jnp.float32)

    # Torch-layout conv weights: conv1 (d_inner, d_model, k), conv2 (d_model, d_inner, k)
    w1_t = jax.random.normal(kw1, (D_INNER, D, K), jnp.float32) / math.sqrt(D * K)
    b1 = 0.1 * jax.random.normal(kb1, (D_INNER,), jnp.float32)
    w2_t = jax.random.normal(kw2, (D, D_INNER, K), jnp.float32) / math.sqrt(D_INNER * K)
    b2 = 0.1 * jax.random.normal(kb2, (D,), jnp.float32)

    # Kernel layout: (k, c_in, c_out) so each tap is a (c_in, c_out) MXU matmul.
    w1 = jnp.transpose(w1_t, (2, 1, 0))     # (K, D, D_INNER)
    w2 = jnp.transpose(w2_t, (2, 1, 0))     # (K, D_INNER, D)

    # Eval mode (dropout identity) -> deterministic, checkable against XLA conv.
    y = pos_conv_ff_forward(x, gamma, beta, w1, b1, w2, b2,
                            dropout_p=0.1, training=False)
    y = jax.block_until_ready(y)

    y_ref = ref_forward(x, gamma, beta, w1_t, b1, w2_t, b2, pad=PAD)
    assert y.shape == (B, T, D)
    assert jnp.allclose(y, y_ref, atol=1e-3, rtol=1e-3), "eval-mode mismatch vs reference"

    # Training mode exercises the dropout-mask path.
    y_tr = pos_conv_ff_forward(x, gamma, beta, w1, b1, w2, b2,
                               dropout_p=0.1, training=True, rng=kdrop)
    y_tr = jax.block_until_ready(y_tr)
    assert y_tr.shape == (B, T, D)
    assert bool(jnp.all(jnp.isfinite(y_tr))), "training-mode produced non-finite values"

    print("KERNEL_OK")
</pallas_src>

<mosaic_0001>
module attributes {stable_mosaic.version = 11 : i64} {
  func.func @posconvff_kernel(%arg0: i32, %arg1: memref<1x16x128xf32, #tpu.memory_space<vmem>>, %arg2: memref<1x128xf32, #tpu.memory_space<vmem>>, %arg3: memref<1x128xf32, #tpu.memory_space<vmem>>, %arg4: memref<3x128x256xf32, #tpu.memory_space<vmem>>, %arg5: memref<1x256xf32, #tpu.memory_space<vmem>>, %arg6: memref<3x256x128xf32, #tpu.memory_space<vmem>>, %arg7: memref<1x128xf32, #tpu.memory_space<vmem>>, %arg8: memref<1x16x128xf32, #tpu.memory_space<vmem>>) attributes {dimension_semantics = [#tpu.dimension_semantics<parallel>], iteration_bounds = array<i64: 2>, scalar_prefetch = 0 : i64, scratch_operands = 0 : i64, tpu.core_type = #tpu.core_type<tc>, window_params = [{transform_indices = @transform_0, window_bounds = array<i64: 1, 16, 128>}, {pipeline_mode = #tpu.pipeline_mode<synchronous>, transform_indices = @transform_1, window_bounds = array<i64: 1, 128>}, {pipeline_mode = #tpu.pipeline_mode<synchronous>, transform_indices = @transform_2, window_bounds = array<i64: 1, 128>}, {pipeline_mode = #tpu.pipeline_mode<synchronous>, transform_indices = @transform_3, window_bounds = array<i64: 3, 128, 256>}, {pipeline_mode = #tpu.pipeline_mode<synchronous>, transform_indices = @transform_4, window_bounds = array<i64: 1, 256>}, {pipeline_mode = #tpu.pipeline_mode<synchronous>, transform_indices = @transform_5, window_bounds = array<i64: 3, 256, 128>}, {pipeline_mode = #tpu.pipeline_mode<synchronous>, transform_indices = @transform_6, window_bounds = array<i64: 1, 128>}, {transform_indices = @transform_7, window_bounds = array<i64: 1, 16, 128>}]} {
    %c0 = arith.constant 0 : index
    %c0_0 = arith.constant 0 : index
    %c0_1 = arith.constant 0 : index
    %0 = vector.load %arg1[%c0, %c0_0, %c0_1] : memref<1x16x128xf32, #tpu.memory_space<vmem>>, vector<1x16x128xf32>
    %1 = vector.shape_cast %0 : vector<1x16x128xf32> to vector<16x128xf32>
    %cst = arith.constant dense<0.000000e+00> : vector<16xf32>
    %2 = vector.multi_reduction <add>, %1, %cst [1] : vector<16x128xf32> to vector<16xf32>
    %3 = vector.shape_cast %2 : vector<16xf32> to vector<16x1xf32>
    %cst_2 = arith.constant 1.280000e+02 : f32
    %4 = vector.broadcast %cst_2 : f32 to vector<16x1xf32>
    %5 = arith.divf %3, %4 : vector<16x1xf32>
    %6 = vector.broadcast %5 : vector<16x1xf32> to vector<16x128xf32>
    %7 = arith.subf %1, %6 : vector<16x128xf32>
    %8 = arith.mulf %7, %7 : vector<16x128xf32>
    %cst_3 = arith.constant dense<0.000000e+00> : vector<16xf32>
    %9 = vector.multi_reduction <add>, %8, %cst_3 [1] : vector<16x128xf32> to vector<16xf32>
    %10 = vector.shape_cast %9 : vector<16xf32> to vector<16x1xf32>
    %cst_4 = arith.constant 1.280000e+02 : f32
    %11 = vector.broadcast %cst_4 : f32 to vector<16x1xf32>
    %12 = arith.divf %10, %11 : vector<16x1xf32>
    %13 = vector.broadcast %5 : vector<16x1xf32> to vector<16x128xf32>
    %14 = arith.subf %1, %13 : vector<16x128xf32>
    %cst_5 = arith.constant 9.99999974E-6 : f32
    %15 = vector.broadcast %cst_5 : f32 to vector<16x1xf32>
    %16 = arith.addf %12, %15 : vector<16x1xf32>
    %17 = math.rsqrt %16 : vector<16x1xf32>
    %18 = vector.broadcast %17 : vector<16x1xf32> to vector<16x128xf32>
    %19 = arith.mulf %14, %18 : vector<16x128xf32>
    %c0_6 = arith.constant 0 : index
    %c0_7 = arith.constant 0 : index
    %20 = vector.load %arg2[%c0_6, %c0_7] : memref<1x128xf32, #tpu.memory_space<vmem>>, vector<1x128xf32>
    %21 = vector.broadcast %20 : vector<1x128xf32> to vector<16x128xf32>
    %22 = arith.mulf %19, %21 : vector<16x128xf32>
    %c0_8 = arith.constant 0 : index
    %c0_9 = arith.constant 0 : index
    %23 = vector.load %arg3[%c0_8, %c0_9] : memref<1x128xf32, #tpu.memory_space<vmem>>, vector<1x128xf32>
    %24 = vector.broadcast %23 : vector<1x128xf32> to vector<16x128xf32>
    %25 = arith.addf %22, %24 : vector<16x128xf32>
    %cst_10 = arith.constant 0.000000e+00 : f32
    %26 = vector.broadcast %cst_10 : f32 to vector<1x128xf32>
    %27 = tpu.concatenate %26, %25, %26 in 0 : vector<1x128xf32>, vector<16x128xf32>, vector<1x128xf32> -> vector<18x128xf32>
    %cst_11 = arith.constant 0.000000e+00 : f32
    %28 = vector.broadcast %cst_11 : f32 to vector<16x256xf32>
    %29 = vector.extract_strided_slice %27 {offsets = [0, 0], sizes = [16, 128], strides = [1, 1]} : vector<18x128xf32> to vector<16x128xf32>
    %c0_12 = arith.constant 0 : index
    %c0_13 = arith.constant 0 : index
    %c0_14 = arith.constant 0 : index
    %30 = vector.load %arg4[%c0_12, %c0_13, %c0_14] : memref<3x128x256xf32, #tpu.memory_space<vmem>>, vector<1x128x256xf32>
    %31 = vector.shape_cast %30 : vector<1x128x256xf32> to vector<128x256xf32>
    %cst_15 = arith.constant dense<0.000000e+00> : vector<16x256xf32>
    %32 = tpu.matmul %29, %31, %cst_15 {dimension_numbers = #tpu.dot_dimension_numbers<[1], [0], [0], [1], [0, 0, 1, 1], [], []>} : vector<16x128xf32>, vector<128x256xf32>, vector<16x256xf32> -> vector<16x256xf32>
    %33 = arith.addf %28, %32 : vector<16x256xf32>
    %34 = vector.extract_strided_slice %27 {offsets = [1, 0], sizes = [16, 128], strides = [1, 1]} : vector<18x128xf32> to vector<16x128xf32>
    %c1 = arith.constant 1 : index
    %c0_16 = arith.constant 0 : index
    %c0_17 = arith.constant 0 : index
    %35 = vector.load %arg4[%c1, %c0_16, %c0_17] : memref<3x128x256xf32, #tpu.memory_space<vmem>>, vector<1x128x256xf32>
    %36 = vector.shape_cast %35 : vector<1x128x256xf32> to vector<128x256xf32>
    %cst_18 = arith.constant dense<0.000000e+00> : vector<16x256xf32>
    %37 = tpu.matmul %34, %36, %cst_18 {dimension_numbers = #tpu.dot_dimension_numbers<[1], [0], [0], [1], [0, 0, 1, 1], [], []>} : vector<16x128xf32>, vector<128x256xf32>, vector<16x256xf32> -> vector<16x256xf32>
    %38 = arith.addf %33, %37 : vector<16x256xf32>
    %39 = vector.extract_strided_slice %27 {offsets = [2, 0], sizes = [16, 128], strides = [1, 1]} : vector<18x128xf32> to vector<16x128xf32>
    %c2 = arith.constant 2 : index
    %c0_19 = arith.constant 0 : index
    %c0_20 = arith.constant 0 : index
    %40 = vector.load %arg4[%c2, %c0_19, %c0_20] : memref<3x128x256xf32, #tpu.memory_space<vmem>>, vector<1x128x256xf32>
    %41 = vector.shape_cast %40 : vector<1x128x256xf32> to vector<128x256xf32>
    %cst_21 = arith.constant dense<0.000000e+00> : vector<16x256xf32>
    %42 = tpu.matmul %39, %41, %cst_21 {dimension_numbers = #tpu.dot_dimension_numbers<[1], [0], [0], [1], [0, 0, 1, 1], [], []>} : vector<16x128xf32>, vector<128x256xf32>, vector<16x256xf32> -> vector<16x256xf32>
    %43 = arith.addf %38, %42 : vector<16x256xf32>
    %c0_22 = arith.constant 0 : index
    %c0_23 = arith.constant 0 : index
    %44 = vector.load %arg5[%c0_22, %c0_23] : memref<1x256xf32, #tpu.memory_space<vmem>>, vector<1x256xf32>
    %45 = vector.broadcast %44 : vector<1x256xf32> to vector<16x256xf32>
    %46 = arith.addf %43, %45 : vector<16x256xf32>
    %cst_24 = arith.constant 0.000000e+00 : f32
    %47 = vector.broadcast %cst_24 : f32 to vector<16x256xf32>
    %48 = arith.maximumf %46, %47 : vector<16x256xf32>
    %cst_25 = arith.constant 0.000000e+00 : f32
    %49 = vector.broadcast %cst_25 : f32 to vector<1x256xf32>
    %50 = tpu.concatenate %49, %48, %49 in 0 : vector<1x256xf32>, vector<16x256xf32>, vector<1x256xf32> -> vector<18x256xf32>
    %cst_26 = arith.constant 0.000000e+00 : f32
    %51 = vector.broadcast %cst_26 : f32 to vector<16x128xf32>
    %52 = vector.extract_strided_slice %50 {offsets = [0, 0], sizes = [16, 256], strides = [1, 1]} : vector<18x256xf32> to vector<16x256xf32>
    %c0_27 = arith.constant 0 : index
    %c0_28 = arith.constant 0 : index
    %c0_29 = arith.constant 0 : index
    %53 = vector.load %arg6[%c0_27, %c0_28, %c0_29] : memref<3x256x128xf32, #tpu.memory_space<vmem>>, vector<1x256x128xf32>
    %54 = vector.shape_cast %53 : vector<1x256x128xf32> to vector<256x128xf32>
    %cst_30 = arith.constant dense<0.000000e+00> : vector<16x128xf32>
    %55 = tpu.matmul %52, %54, %cst_30 {dimension_numbers = #tpu.dot_dimension_numbers<[1], [0], [0], [1], [0, 0, 1, 1], [], []>} : vector<16x256xf32>, vector<256x128xf32>, vector<16x128xf32> -> vector<16x128xf32>
    %56 = arith.addf %51, %55 : vector<16x128xf32>
    %57 = vector.extract_strided_slice %50 {offsets = [1, 0], sizes = [16, 256], strides = [1, 1]} : vector<18x256xf32> to vector<16x256xf32>
    %c1_31 = arith.constant 1 : index
    %c0_32 = arith.constant 0 : index
    %c0_33 = arith.constant 0 : index
    %58 = vector.load %arg6[%c1_31, %c0_32, %c0_33] : memref<3x256x128xf32, #tpu.memory_space<vmem>>, vector<1x256x128xf32>
    %59 = vector.shape_cast %58 : vector<1x256x128xf32> to vector<256x128xf32>
    %cst_34 = arith.constant dense<0.000000e+00> : vector<16x128xf32>
    %60 = tpu.matmul %57, %59, %cst_34 {dimension_numbers = #tpu.dot_dimension_numbers<[1], [0], [0], [1], [0, 0, 1, 1], [], []>} : vector<16x256xf32>, vector<256x128xf32>, vector<16x128xf32> -> vector<16x128xf32>
    %61 = arith.addf %56, %60 : vector<16x128xf32>
    %62 = vector.extract_strided_slice %50 {offsets = [2, 0], sizes = [16, 256], strides = [1, 1]} : vector<18x256xf32> to vector<16x256xf32>
    %c2_35 = arith.constant 2 : index
    %c0_36 = arith.constant 0 : index
    %c0_37 = arith.constant 0 : index
    %63 = vector.load %arg6[%c2_35, %c0_36, %c0_37] : memref<3x256x128xf32, #tpu.memory_space<vmem>>, vector<1x256x128xf32>
    %64 = vector.shape_cast %63 : vector<1x256x128xf32> to vector<256x128xf32>
    %cst_38 = arith.constant dense<0.000000e+00> : vector<16x128xf32>
    %65 = tpu.matmul %62, %64, %cst_38 {dimension_numbers = #tpu.dot_dimension_numbers<[1], [0], [0], [1], [0, 0, 1, 1], [], []>} : vector<16x256xf32>, vector<256x128xf32>, vector<16x128xf32> -> vector<16x128xf32>
    %66 = arith.addf %61, %65 : vector<16x128xf32>
    %c0_39 = arith.constant 0 : index
    %c0_40 = arith.constant 0 : index
    %67 = vector.load %arg7[%c0_39, %c0_40] : memref<1x128xf32, #tpu.memory_space<vmem>>, vector<1x128xf32>
    %68 = vector.broadcast %67 : vector<1x128xf32> to vector<16x128xf32>
    %69 = arith.addf %66, %68 : vector<16x128xf32>
    %70 = arith.addf %69, %1 : vector<16x128xf32>
    %c0_41 = arith.constant 0 : index
    %c0_42 = arith.constant 0 : index
    %c0_43 = arith.constant 0 : index
    %71 = vector.load %arg8[%c0_41, %c0_42, %c0_43] : memref<1x16x128xf32, #tpu.memory_space<vmem>>, vector<1x16x128xf32>
    %72 = vector.shape_cast %71 : vector<1x16x128xf32> to vector<16x128xf32>
    %73 = vector.shape_cast %70 : vector<16x128xf32> to vector<1x16x128xf32>
    tpu.vector_store %arg8[%c0_41, %c0_42, %c0_43], %73 {strides = array<i32>} : memref<1x16x128xf32, #tpu.memory_space<vmem>>, vector<1x16x128xf32>,
    return
  }
  func.func @transform_0(%arg0: i32) -> (i32, i32, i32) {
    %c0_i32 = arith.constant 0 : i32
    %c0_i32_0 = arith.constant 0 : i32
    %c0_i32_1 = arith.constant 0 : i32
    return %arg0, %c0_i32, %c0_i32_0 : i32, i32, i32
  }
  func.func @transform_1(%arg0: i32) -> (i32, i32) {
    %c0_i32 = arith.constant 0 : i32
    %c0_i32_0 = arith.constant 0 : i32
    %c0_i32_1 = arith.constant 0 : i32
    return %c0_i32, %c0_i32_0 : i32, i32
  }
  func.func @transform_2(%arg0: i32) -> (i32, i32) {
    %c0_i32 = arith.constant 0 : i32
    %c0_i32_0 = arith.constant 0 : i32
    %c0_i32_1 = arith.constant 0 : i32
    return %c0_i32, %c0_i32_0 : i32, i32
  }
  func.func @transform_3(%arg0: i32) -> (i32, i32, i32) {
    %c0_i32 = arith.constant 0 : i32
    %c0_i32_0 = arith.constant 0 : i32
    %c0_i32_1 = arith.constant 0 : i32
    %c0_i32_2 = arith.constant 0 : i32
    return %c0_i32, %c0_i32_0, %c0_i32_1 : i32, i32, i32
  }
  func.func @transform_4(%arg0: i32) -> (i32, i32) {
    %c0_i32 = arith.constant 0 : i32
    %c0_i32_0 = arith.constant 0 : i32
    %c0_i32_1 = arith.constant 0 : i32
    return %c0_i32, %c0_i32_0 : i32, i32
  }
  func.func @transform_5(%arg0: i32) -> (i32, i32, i32) {
    %c0_i32 = arith.constant 0 : i32
    %c0_i32_0 = arith.constant 0 : i32
    %c0_i32_1 = arith.constant 0 : i32
    %c0_i32_2 = arith.constant 0 : i32
    return %c0_i32, %c0_i32_0, %c0_i32_1 : i32, i32, i32
  }
  func.func @transform_6(%arg0: i32) -> (i32, i32) {
    %c0_i32 = arith.constant 0 : i32
    %c0_i32_0 = arith.constant 0 : i32
    %c0_i32_1 = arith.constant 0 : i32
    return %c0_i32, %c0_i32_0 : i32, i32
  }
  func.func @transform_7(%arg0: i32) -> (i32, i32, i32) {
    %c0_i32 = arith.constant 0 : i32
    %c0_i32_0 = arith.constant 0 : i32
    %c0_i32_1 = arith.constant 0 : i32
    return %arg0, %c0_i32, %c0_i32_0 : i32, i32, i32
  }
}

</mosaic_0001>

<llo_original>
// kernel: tpu_custom_call.1
$region0: #{tpu_custom_call.1}
  #allocation0 [shape = 'u32[]', space=smem, size = 0x4, offset = 0x4, fixed_abs, tag = 'smem constant byte address 0x4 - core index']
  #allocation1 [shape = 'u32[144,128]{1,0:T(1,128)}', space=vmem, size = 0x12000, scoped, tag = 'internal scratch']
  %s0 = inlined_call_operand.hbm [shape: f32[2,16,128], index: 0, kind: input, shape index: {}]
  %s1 = inlined_call_operand.vmem [shape: f32[1,128], index: 1, kind: input, shape index: {}]
  %s2 = inlined_call_operand.vmem [shape: f32[1,128], index: 2, kind: input, shape index: {}]
  %s3 = inlined_call_operand.hbm [shape: f32[3,128,256], index: 3, kind: input, shape index: {}]
  %s4 = inlined_call_operand.vmem [shape: f32[1,256], index: 4, kind: input, shape index: {}]
  %s5 = inlined_call_operand.hbm [shape: f32[3,256,128], index: 5, kind: input, shape index: {}]
  %s6 = inlined_call_operand.vmem [shape: f32[1,128], index: 6, kind: input, shape index: {}]
  %s7 = inlined_call_operand.hbm [shape: f32[2,16,128], index: 7, kind: output, shape index: {}]
  %s8 = sld [smem:[#allocation0]]
  $region73: #{tpu_custom_call.1} parent=0
    _
  %s10 = ssub.s32 1, %s8
  %s11 = scalar_select 0, %s10, %s8
  $region1: #{tpu_custom_call.1} parent=0
    #allocation2 [shape = 'u8[16384]{0}', space=vmem, size = 0x4000, scoped, tag = 'input window, operand 0']
    #allocation3 [shape = 's32[2]{0}', space=sflag, size = 0x8, scoped, tag = 'scoped memory for tpu_custom_call.1']
    #allocation4 [shape = 's32[2]{0}', space=sflag, size = 0x8, scoped, tag = 'scoped memory for tpu_custom_call.1']
    #allocation5 [shape = 'u8[393216]{0}', space=vmem, size = 0x60000, scoped, tag = 'input window, operand 3, single buffered']
    #allocation6 [shape = 's32[1]{0}', space=sflag, size = 0x4, scoped, tag = 'scoped memory for tpu_custom_call.1']
    #allocation7 [shape = 'u8[393216]{0}', space=vmem, size = 0x60000, scoped, tag = 'input window, operand 5, single buffered']
    #allocation8 [shape = 'u8[16384]{0}', space=vmem, size = 0x4000, scoped, tag = 'output window, operand 0']
    %12 = vsyncpa [#allocation3], 0
    %s13 = scalar_lea.sflag [#allocation3], 1
    %14 = vsyncpa %s13, 0
    %15 = vsyncpa [#allocation6], 0
    %16 = vsyncpa [#allocation4], 0
    %s17 = scalar_lea.sflag [#allocation4], 1
    %18 = vsyncpa %s17, 0
    loop: start=0, step=1, limit=4
    $region2: #{tpu_custom_call.1} parent=1 // loop_pre_header
      _
    $region3: #{tpu_custom_call.1} parent=1 // loop_header
      %s20 = sphi 0, %s24
      %p21 = scmp.ge.s32.totalorder %s20, 4
      %s30 = sphi 0, %s32
      %s33 = sphi 0, %s30
      %s34 = sphi 0, %s33
      %s50 = sphi 0, %s34
      %s54 = sphi 0, %s54
      %s56 = sphi 0, %s54
      %s57 = sphi 0, %s56
      %s71 = sphi 0, %s57
      %s75 = sphi 0, %s75
      %s77 = sphi 0, %s75
      %s78 = sphi 0, %s77
      %s92 = sphi 0, %s78
      %s96 = sphi 0, %s96
      %s98 = sphi 0, %s96
      %s99 = sphi 0, %s98
      %s113 = sphi 0, %s99
      %s117 = sphi 0, %s117
      %s119 = sphi 0, %s117
      %s120 = sphi 0, %s119
      %s134 = sphi 0, %s120
      %s138 = sphi 0, %s138
      %s140 = sphi 0, %s138
      %s141 = sphi 0, %s140
      %s155 = sphi 0, %s141
      %s159 = sphi 0, %s159
      %s161 = sphi 0, %s159
      %s162 = sphi 0, %s161
      %s176 = sphi 0, %s162
      %s182 = sphi 0, %s184
      %s185 = sphi 0, %s182
      %s186 = sphi 0, %s185
      %s202 = sphi 0, %s186
    $region4: #{tpu_custom_call.1} parent=1 // loop_header_branch
      %23 = sbr.rel (%p21) target = $region8
    $region5: #{tpu_custom_call.1} parent=1 // loop_body
      %s25 = ssub.s32 %s20, 1
      %s26 = ssub.s32 %s20, 2
      %s27 = sadd.s32 %s20, 1
      %s28 = ssub.s32 %s20, %s27
      %p29 = scmp.eq.s32.totalorder %s28, 0
      %s31 = sadd.s32 %s30, 1
      %s32 = scalar_select %p29, %s30, %s31
      %p35 = pneg %p29
      %p36 = scmp.eq.s32.totalorder %s20, 1
      %p37 = por %p35, %p36
      %p38 = scmp.ne.s32.totalorder %s30, %s33
      %p39 = scmp.eq.s32.totalorder %s20, 0
      %p40 = por %p38, %p39
      %p41 = scmp.ne.s32.totalorder %s30, %s33
      %p42 = scmp.eq.s32.totalorder %s25, 1
      %p43 = por %p41, %p42
      %p44 = scmp.ne.s32.totalorder %s33, %s34
      %p45 = scmp.eq.s32.totalorder %s25, 0
      %p46 = por %p44, %p45
      %p47 = scmp.ne.s32.totalorder %s33, %s34
      %p48 = scmp.eq.s32.totalorder %s26, 1
      %p49 = por %p47, %p48
      %p51 = scmp.ne.s32.totalorder %s34, %s50
      %p52 = scmp.eq.s32.totalorder %s26, 0
      %p53 = por %p51, %p52
      %s55 = sadd.s32 %s54, 1
      %p58 = scmp.eq.s32.totalorder %s20, 1
      %p59 = scmp.ne.s32.totalorder %s54, %s56
      %p60 = scmp.eq.s32.totalorder %s20, 0
      %p61 = por %p59, %p60
      %p62 = scmp.ne.s32.totalorder %s54, %s56
      %p63 = scmp.eq.s32.totalorder %s25, 1
      %p64 = por %p62, %p63
      %p65 = scmp.ne.s32.totalorder %s56, %s57
      %p66 = scmp.eq.s32.totalorder %s25, 0
      %p67 = por %p65, %p66
      %p68 = scmp.ne.s32.totalorder %s56, %s57
      %p69 = scmp.eq.s32.totalorder %s26, 1
      %p70 = por %p68, %p69
      %p72 = scmp.ne.s32.totalorder %s57, %s71
      %p73 = scmp.eq.s32.totalorder %s26, 0
      %p74 = por %p72, %p73
      %s76 = sadd.s32 %s75, 1
      %p79 = scmp.eq.s32.totalorder %s20, 1
      %p80 = scmp.ne.s32.totalorder %s75, %s77
      %p81 = scmp.eq.s32.totalorder %s20, 0
      %p82 = por %p80, %p81
      %p83 = scmp.ne.s32.totalorder %s75, %s77
      %p84 = scmp.eq.s32.totalorder %s25, 1
      %p85 = por %p83, %p84
      %p86 = scmp.ne.s32.totalorder %s77, %s78
      %p87 = scmp.eq.s32.totalorder %s25, 0
      %p88 = por %p86, %p87
      %p89 = scmp.ne.s32.totalorder %s77, %s78
      %p90 = scmp.eq.s32.totalorder %s26, 1
      %p91 = por %p89, %p90
      %p93 = scmp.ne.s32.totalorder %s78, %s92
      %p94 = scmp.eq.s32.totalorder %s26, 0
      %p95 = por %p93, %p94
      %s97 = sadd.s32 %s96, 1
      %p100 = scmp.eq.s32.totalorder %s20, 1
      %p101 = scmp.ne.s32.totalorder %s96, %s98
      %p102 = scmp.eq.s32.totalorder %s20, 0
      %p103 = por %p101, %p102
      %p104 = scmp.ne.s32.totalorder %s96, %s98
      %p105 = scmp.eq.s32.totalorder %s25, 1
      %p106 = por %p104, %p105
      %p107 = scmp.ne.s32.totalorder %s98, %s99
      %p108 = scmp.eq.s32.totalorder %s25, 0
      %p109 = por %p107, %p108
      %p110 = scmp.ne.s32.totalorder %s98, %s99
      %p111 = scmp.eq.s32.totalorder %s26, 1
      %p112 = por %p110, %p111
      %p114 = scmp.ne.s32.totalorder %s99, %s113
      %p115 = scmp.eq.s32.totalorder %s26, 0
      %p116 = por %p114, %p115
      %s118 = sadd.s32 %s117, 1
      %p121 = scmp.eq.s32.totalorder %s20, 1
      %p122 = scmp.ne.s32.totalorder %s117, %s119
      %p123 = scmp.eq.s32.totalorder %s20, 0
      %p124 = por %p122, %p123
      %p125 = scmp.ne.s32.totalorder %s117, %s119
      %p126 = scmp.eq.s32.totalorder %s25, 1
      %p127 = por %p125, %p126
      %p128 = scmp.ne.s32.totalorder %s119, %s120
      %p129 = scmp.eq.s32.totalorder %s25, 0
      %p130 = por %p128, %p129
      %p131 = scmp.ne.s32.totalorder %s119, %s120
      %p132 = scmp.eq.s32.totalorder %s26, 1
      %p133 = por %p131, %p132
      %p135 = scmp.ne.s32.totalorder %s120, %s134
      %p136 = scmp.eq.s32.totalorder %s26, 0
      %p137 = por %p135, %p136
      %s139 = sadd.s32 %s138, 1
      %p142 = scmp.eq.s32.totalorder %s20, 1
      %p143 = scmp.ne.s32.totalorder %s138, %s140
      %p144 = scmp.eq.s32.totalorder %s20, 0
      %p145 = por %p143, %p144
      %p146 = scmp.ne.s32.totalorder %s138, %s140
      %p147 = scmp.eq.s32.totalorder %s25, 1
      %p148 = por %p146, %p147
      %p149 = scmp.ne.s32.totalorder %s140, %s141
      %p150 = scmp.eq.s32.totalorder %s25, 0
      %p151 = por %p149, %p150
      %p152 = scmp.ne.s32.totalorder %s140, %s141
      %p153 = scmp.eq.s32.totalorder %s26, 1
      %p154 = por %p152, %p153
      %p156 = scmp.ne.s32.totalorder %s141, %s155
      %p157 = scmp.eq.s32.totalorder %s26, 0
      %p158 = por %p156, %p157
      %s160 = sadd.s32 %s159, 1
      %p163 = scmp.eq.s32.totalorder %s20, 1
      %p164 = scmp.ne.s32.totalorder %s159, %s161
      %p165 = scmp.eq.s32.totalorder %s20, 0
      %p166 = por %p164, %p165
      %p167 = scmp.ne.s32.totalorder %s159, %s161
      %p168 = scmp.eq.s32.totalorder %s25, 1
      %p169 = por %p167, %p168
      %p170 = scmp.ne.s32.totalorder %s161, %s162
      %p171 = scmp.eq.s32.totalorder %s25, 0
      %p172 = por %p170, %p171
      %p173 = scmp.ne.s32.totalorder %s161, %s162
      %p174 = scmp.eq.s32.totalorder %s26, 1
      %p175 = por %p173, %p174
      %p177 = scmp.ne.s32.totalorder %s162, %s176
      %p178 = scmp.eq.s32.totalorder %s26, 0
      %p179 = por %p177, %p178
      %s180 = ssub.s32 %s20, %s27
      %p181 = scmp.eq.s32.totalorder %s180, 0
      %s183 = sadd.s32 %s182, 1
      %s184 = scalar_select %p181, %s182, %s183
      %p187 = pneg %p181
      %p188 = scmp.eq.s32.totalorder %s20, 1
      %p189 = por %p187, %p188
      %p190 = scmp.ne.s32.totalorder %s182, %s185
      %p191 = scmp.eq.s32.totalorder %s20, 0
      %p192 = por %p190, %p191
      %p193 = scmp.ne.s32.totalorder %s182, %s185
      %p194 = scmp.eq.s32.totalorder %s25, 1
      %p195 = por %p193, %p194
      %p196 = scmp.ne.s32.totalorder %s185, %s186
      %p197 = scmp.eq.s32.totalorder %s25, 0
      %p198 = por %p196, %p197
      %p199 = scmp.ne.s32.totalorder %s185, %s186
      %p200 = scmp.eq.s32.totalorder %s26, 1
      %p201 = por %p199, %p200
      %p203 = scmp.ne.s32.totalorder %s186, %s202
      %p204 = scmp.eq.s32.totalorder %s26, 0
      %p205 = por %p203, %p204
      %p206 = scmp.le.s32.totalorder 1, %s20
      %p207 = scmp.lt.s32.totalorder %s20, 3
      %p208 = pnand %p206, %p207
      %p209 = pneg %p208
      // Predicated region
      $region9: #{tpu_custom_call.1} parent=5 // pred_check
        _
      $region10: #{tpu_custom_call.1} parent=5 // pred_check_branch
        %211 = sbr.rel (%p208) target = $region12
      $region11: #{tpu_custom_call.1} parent=5 // pred_region
        %s212 = ssub.s32 %s20, 1
        // Predicated region
        $region13: #{tpu_custom_call.1} parent=11 // pred_check
          %p213 = pneg %p67
        $region14: #{tpu_custom_call.1} parent=11 // pred_check_branch
          %215 = sbr.rel (%p213) target = $region16
        $region15: #{tpu_custom_call.1} parent=11 // pred_region
          _
        $region16: #{tpu_custom_call.1} parent=11 // pred_fallthru
          _
        // Predicated region
        $region17: #{tpu_custom_call.1} parent=11 // pred_check
          %p216 = pneg %p88
        $region18: #{tpu_custom_call.1} parent=11 // pred_check_branch
          %218 = sbr.rel (%p216) target = $region20
        $region19: #{tpu_custom_call.1} parent=11 // pred_region
          _
        $region20: #{tpu_custom_call.1} parent=11 // pred_fallthru
          _
        // Predicated region
        $region21: #{tpu_custom_call.1} parent=11 // pred_check
          %p219 = pneg %p109
        $region22: #{tpu_custom_call.1} parent=11 // pred_check_branch
          %221 = sbr.rel (%p219) target = $region24
        $region23: #{tpu_custom_call.1} parent=11 // pred_region
          %s223 = ssub.s32 12288, 12288
          %224 = vsyncadd [#allocation6], %s223
          %s225 = sshll.u32 [#allocation5], 4
          %s226 = int_to_ptr.vmem [resolvable:$true] %s225
          %231 = dma.hbm_to_vmem [thread:$0]  %s3, 12288, %s226, [#allocation6], 256, 256, 16
        $region24: #{tpu_custom_call.1} parent=11 // pred_fallthru
          _
        // Predicated region
        $region25: #{tpu_custom_call.1} parent=11 // pred_check
          %p232 = pneg %p130
        $region26: #{tpu_custom_call.1} parent=11 // pred_check_branch
          %234 = sbr.rel (%p232) target = $region28
        $region27: #{tpu_custom_call.1} parent=11 // pred_region
          _
        $region28: #{tpu_custom_call.1} parent=11 // pred_fallthru
          _
        // Predicated region
        $region29: #{tpu_custom_call.1} parent=11 // pred_check
          %p235 = pneg %p151
        $region30: #{tpu_custom_call.1} parent=11 // pred_check_branch
          %237 = sbr.rel (%p235) target = $region32
        $region31: #{tpu_custom_call.1} parent=11 // pred_region
          %s239 = ssub.s32 12288, 12288
          %240 = vsyncadd [#allocation6], %s239
          %s241 = sshll.u32 [#allocation7], 4
          %s242 = int_to_ptr.vmem [resolvable:$true] %s241
          %247 = dma.hbm_to_vmem [thread:$0]  %s5, 12288, %s242, [#allocation6], 128, 128, 8
        $region32: #{tpu_custom_call.1} parent=11 // pred_fallthru
          _
        // Predicated region
        $region33: #{tpu_custom_call.1} parent=11 // pred_check
          %p248 = pneg %p172
        $region34: #{tpu_custom_call.1} parent=11 // pred_check_branch
          %250 = sbr.rel (%p248) target = $region36
        $region35: #{tpu_custom_call.1} parent=11 // pred_region
          _
        $region36: #{tpu_custom_call.1} parent=11 // pred_fallthru
          _
      $region12: #{tpu_custom_call.1} parent=5 // pred_fallthru
        _
      %p251 = scmp.lt.s32.totalorder %s20, 2
      // Predicated region
      $region37: #{tpu_custom_call.1} parent=5 // pred_check
        %p252 = pneg %p251
      $region38: #{tpu_custom_call.1} parent=5 // pred_check_branch
        %254 = sbr.rel (%p252) target = $region40
      $region39: #{tpu_custom_call.1} parent=5 // pred_region
        // Predicated region
        $region41: #{tpu_custom_call.1} parent=39 // pred_check
          %p255 = pneg %p40
        $region42: #{tpu_custom_call.1} parent=39 // pred_check_branch
          %257 = sbr.rel (%p255) target = $region44
        $region43: #{tpu_custom_call.1} parent=39 // pred_region
          %s258 = sand.u32 %s30, 1
          %s259 = scalar_lea.sflag [#allocation3], %s258
          %s260 = sand.u32 %s30, 1
          %s261 = smul.addr %s260, 16
          %s262 = scalar_lea.vmem [#allocation2], %s261
          %s264 = ssub.s32 256, 256
          %265 = vsyncadd %s259, %s264
          %s266 = smul.addr %s20, 2
          %s267 = smul.addr %s266, 128
          %s268 = scalar_lea.hbm %s0, %s267
          %s269 = sshll.u32 %s262, 4
          %s270 = int_to_ptr.vmem [resolvable:$true] %s269
          %275 = dma.hbm_to_vmem [thread:$0]  %s268, 256, %s270, %s259, 128, 128, 8
        $region44: #{tpu_custom_call.1} parent=39 // pred_fallthru
          _
      $region40: #{tpu_custom_call.1} parent=5 // pred_fallthru
        _
      %p276 = scmp.le.s32.totalorder 1, %s20
      %p277 = scmp.lt.s32.totalorder %s20, 3
      %p278 = pnand %p276, %p277
      %p279 = pneg %p278
      // Predicated region
      $region45: #{tpu_custom_call.1} parent=5 // pred_check
        _
      $region46: #{tpu_custom_call.1} parent=5 // pred_check_branch
        %281 = sbr.rel (%p278) target = $region48
      $region47: #{tpu_custom_call.1} parent=5 // pred_region
        %s282 = ssub.s32 %s20, 1
        %s283 = sand.u32 %s33, 1
        %s284 = scalar_lea.sflag [#allocation3], %s283
        %s285 = sand.u32 %s33, 1
        %s286 = smul.addr %s285, 16
        %s287 = scalar_lea.vmem [#allocation2], %s286
        // Predicated region
        $region49: #{tpu_custom_call.1} parent=47 // pred_check
          %p288 = pneg %p46
        $region50: #{tpu_custom_call.1} parent=47 // pred_check_branch
          %290 = sbr.rel (%p288) target = $region52
        $region51: #{tpu_custom_call.1} parent=47 // pred_region
          %291 = dma.done %s284, 256
        $region52: #{tpu_custom_call.1} parent=47 // pred_fallthru
          _
        // Predicated region
        $region53: #{tpu_custom_call.1} parent=47 // pred_check
          %p292 = pneg %p109
        $region54: #{tpu_custom_call.1} parent=47 // pred_check_branch
          %294 = sbr.rel (%p292) target = $region56
        $region55: #{tpu_custom_call.1} parent=47 // pred_region
          %295 = dma.done [#allocation6], 12288
        $region56: #{tpu_custom_call.1} parent=47 // pred_fallthru
          _
        // Predicated region
        $region57: #{tpu_custom_call.1} parent=47 // pred_check
          %p296 = pneg %p151
        $region58: #{tpu_custom_call.1} parent=47 // pred_check_branch
          %298 = sbr.rel (%p296) target = $region60
        $region59: #{tpu_custom_call.1} parent=47 // pred_region
          %299 = dma.done [#allocation6], 12288
        $region60: #{tpu_custom_call.1} parent=47 // pred_fallthru
          _
        %s300 = sand.u32 %s33, 1
        %s301 = scalar_lea.sflag [#allocation3], %s300
        %s302 = sand.u32 %s33, 1
        %s303 = smul.addr %s302, 16
        %s304 = scalar_lea.vmem [#allocation2], %s303
        %p305 = pneg %p46
        %p306 = pneg %p43
        %p307 = pneg %p67
        %p308 = pneg %p64
        %p309 = pneg %p88
        %p310 = pneg %p85
        %p311 = pneg %p109
        %p312 = pneg %p106
        %p313 = pneg %p130
        %p314 = pneg %p127
        %p315 = pneg %p151
        %p316 = pneg %p148
        %p317 = pneg %p172
        %p318 = pneg %p169
        %p319 = pneg %p198
        %p320 = pneg %p195
        %s321 = sand.u32 %s185, 1
        %s322 = scalar_lea.sflag [#allocation4], %s321
        %s323 = sand.u32 %s185, 1
        %s324 = smul.addr %s323, 16
        %s325 = scalar_lea.vmem [#allocation8], %s324
        %v326 = vld [vmem:[%s287] sm:$0xff]
        %v327 = vld [vmem:[%s287 + $0x8] sm:$0xff]
        %328 = vadd.xlane.f32.xlu0 %v326
        %v329 = vpop.xlane.xlu0 %328
        %330 = vadd.xlane.f32.xlu0 %v327
        %v331 = vpop.xlane.xlu0 %330
        %v332 = vrcp.pop 128.0
        %v333 = vmul.f32 %v329, %v332
        %v334 = vmul.f32 %v331, %v332
        %v335 = vsub.f32 %v326, %v333
        %v336 = vsub.f32 %v327, %v334
        %v337 = vmul.f32 %v335, %v335
        %v338 = vmul.f32 %v336, %v336
        %339 = vadd.xlane.f32.xlu0 %v337
        %v340 = vpop.xlane.xlu0 %339
        %341 = vadd.xlane.f32.xlu0 %v338
        %v342 = vpop.xlane.xlu0 %341
        %v343 = vmul.f32 %v340, %v332
        %v344 = vmul.f32 %v342, %v332
        %v345 = vadd.f32 %v343, 1e-05
        %v346 = vadd.f32 %v344, 1e-05
        %v347 = vrsqrt.pop %v345
        %v348 = vrsqrt.pop %v346
        %v349 = vmul.f32 %v335, %v347
        %v350 = vmul.f32 %v336, %v348
        %v351 = vld [vmem:[%s1] sm:$0x1]
        %v353 = vlaneseq
        %v354 = vshrl.u32 %v353, 7
        %v355 = vsub.s32 0, %v354
        %v356 = vrot.slane %v351, %v355
        %v358 = vmul.f32 %v349, %v356
        %v359 = vmul.f32 %v350, %v356
        %v360 = vld [vmem:[%s2] sm:$0x1]
        %v362 = vlaneseq
        %v363 = vshrl.u32 %v362, 7
        %v364 = vsub.s32 0, %v363
        %v365 = vrot.slane %v360, %v364
        %v367 = vadd.f32 %v358, %v365
        %v368 = vadd.f32 %v359, %v365
        %vm371 = vcmask 1040384
        %v372 = vrot.slane %v367, 7
        %v373 = vrot.slane %v368, 7
        %v374 = vsel %vm371, %v372, %v373
        %v378 = vsel %vm371, 0.0, %v372
        %v379 = vsel %vm371, %v373, 0.0
        %v380 = vld [vmem:[#allocation5] sm:$0xff]
        %v381 = vld [vmem:[#allocation5 + $0x8] sm:$0xff]
        %v382 = vld [vmem:[#allocation5 + $0x10] sm:$0xff]
        %v383 = vld [vmem:[#allocation5 + $0x18] sm:$0xff]
        %v384 = vld [vmem:[#allocation5 + $0x20] sm:$0xff]
        %v385 = vld [vmem:[#allocation5 + $0x28] sm:$0xff]
        %v386 = vld [vmem:[#allocation5 + $0x30] sm:$0xff]
        %v387 = vld [vmem:[#allocation5 + $0x38] sm:$0xff]
        %v388 = vld [vmem:[#allocation5 + $0x40] sm:$0xff]
        %v389 = vld [vmem:[#allocation5 + $0x48] sm:$0xff]
        %v390 = vld [vmem:[#allocation5 + $0x50] sm:$0xff]
        %v391 = vld [vmem:[#allocation5 + $0x58] sm:$0xff]
        %v392 = vld [vmem:[#allocation5 + $0x60] sm:$0xff]
        %v393 = vld [vmem:[#allocation5 + $0x68] sm:$0xff]
        %v394 = vld [vmem:[#allocation5 + $0x70] sm:$0xff]
        %v395 = vld [vmem:[#allocation5 + $0x78] sm:$0xff]
        %v396 = vld [vmem:[#allocation5 + $0x80] sm:$0xff]
        %v397 = vld [vmem:[#allocation5 + $0x88] sm:$0xff]
        %v398 = vld [vmem:[#allocation5 + $0x90] sm:$0xff]
        %v399 = vld [vmem:[#allocation5 + $0x98] sm:$0xff]
        %v400 = vld [vmem:[#allocation5 + $0xa0] sm:$0xff]
        %v401 = vld [vmem:[#allocation5 + $0xa8] sm:$0xff]
        %v402 = vld [vmem:[#allocation5 + $0xb0] sm:$0xff]
        %v403 = vld [vmem:[#allocation5 + $0xb8] sm:$0xff]
        %v404 = vld [vmem:[#allocation5 + $0xc0] sm:$0xff]
        %v405 = vld [vmem:[#allocation5 + $0xc8] sm:$0xff]
        %v406 = vld [vmem:[#allocation5 + $0xd0] sm:$0xff]
        %v407 = vld [vmem:[#allocation5 + $0xd8] sm:$0xff]
        %v408 = vld [vmem:[#allocation5 + $0xe0] sm:$0xff]
        %v409 = vld [vmem:[#allocation5 + $0xe8] sm:$0xff]
        %v410 = vld [vmem:[#allocation5 + $0xf0] sm:$0xff]
        %v411 = vld [vmem:[#allocation5 + $0xf8] sm:$0xff]
        %s412 = scalar_lea.vmem [#allocation5], 256
        %v413 = vld [vmem:[%s412] sm:$0xff]
        %v414 = vld [vmem:[%s412 + $0x8] sm:$0xff]
        %v415 = vld [vmem:[%s412 + $0x10] sm:$0xff]
        %v416 = vld [vmem:[%s412 + $0x18] sm:$0xff]
        %v417 = vld [vmem:[%s412 + $0x20] sm:$0xff]
        %v418 = vld [vmem:[%s412 + $0x28] sm:$0xff]
        %v419 = vld [vmem:[%s412 + $0x30] sm:$0xff]
        %v420 = vld [vmem:[%s412 + $0x38] sm:$0xff]
        %v421 = vld [vmem:[%s412 + $0x40] sm:$0xff]
        %v422 = vld [vmem:[%s412 + $0x48] sm:$0xff]
        %v423 = vld [vmem:[%s412 + $0x50] sm:$0xff]
        %v424 = vld [vmem:[%s412 + $0x58] sm:$0xff]
        %v425 = vld [vmem:[%s412 + $0x60] sm:$0xff]
        %v426 = vld [vmem:[%s412 + $0x68] sm:$0xff]
        %v427 = vld [vmem:[%s412 + $0x70] sm:$0xff]
        %v428 = vld [vmem:[%s412 + $0x78] sm:$0xff]
        %v429 = vld [vmem:[%s412 + $0x80] sm:$0xff]
        %v430 = vld [vmem:[%s412 + $0x88] sm:$0xff]
        %v431 = vld [vmem:[%s412 + $0x90] sm:$0xff]
        %v432 = vld [vmem:[%s412 + $0x98] sm:$0xff]
        %v433 = vld [vmem:[%s412 + $0xa0] sm:$0xff]
        %v434 = vld [vmem:[%s412 + $0xa8] sm:$0xff]
        %v435 = vld [vmem:[%s412 + $0xb0] sm:$0xff]
        %v436 = vld [vmem:[%s412 + $0xb8] sm:$0xff]
        %v437 = vld [vmem:[%s412 + $0xc0] sm:$0xff]
        %v438 = vld [vmem:[%s412 + $0xc8] sm:$0xff]
        %v439 = vld [vmem:[%s412 + $0xd0] sm:$0xff]
        %v440 = vld [vmem:[%s412 + $0xd8] sm:$0xff]
        %v441 = vld [vmem:[%s412 + $0xe0] sm:$0xff]
        %v442 = vld [vmem:[%s412 + $0xe8] sm:$0xff]
        %v443 = vld [vmem:[%s412 + $0xf0] sm:$0xff]
        %v444 = vld [vmem:[%s412 + $0xf8] sm:$0xff]
        %vm447 = vcmask 1046528
        %v448 = vrot.slane %v378, 1
        %v449 = vrot.slane %v374, 1
        %v450 = vsel %vm447, %v448, %v449
        %v451 = vrot.slane %v379, 1
        %v452 = vsel %vm447, %v449, %v451
        %455 = vmatprep.subr.mxu0 %v414
        %456 = vmatpush1.msra.mxu0 %v413
        %457 = vmatprep.subr.mxu0 %v416
        %458 = vmatpush1.msra.mxu0 %v415
        %459 = vmatprep.subr.mxu0 %v418
        %460 = vmatpush1.msra.mxu0 %v417
        %461 = vmatprep.subr.mxu0 %v420
        %462 = vmatpush1.msra.mxu0 %v419
        %463 = vmatprep.subr.mxu0 %v422
        %464 = vmatpush1.msra.mxu0 %v421
        %465 = vmatprep.subr.mxu0 %v424
        %466 = vmatpush1.msra.mxu0 %v423
        %467 = vmatprep.subr.mxu0 %v426
        %468 = vmatpush1.msra.mxu0 %v425
        %469 = vmatprep.subr.mxu0 %v428
        %470 = vmatpush1.msra.mxu0 %v427
        %471 = vmatprep.subr.mxu0 %v430
        %472 = vmatpush1.msra.mxu0 %v429
        %473 = vmatprep.subr.mxu0 %v432
        %474 = vmatpush1.msra.mxu0 %v431
        %475 = vmatprep.subr.mxu0 %v434
        %476 = vmatpush1.msra.mxu0 %v433
        %477 = vmatprep.subr.mxu0 %v436
        %478 = vmatpush1.msra.mxu0 %v435
        %479 = vmatprep.subr.mxu0 %v438
        %480 = vmatpush1.msra.mxu0 %v437
        %481 = vmatprep.subr.mxu0 %v440
        %482 = vmatpush1.msra.mxu0 %v439
        %483 = vmatprep.subr.mxu0 %v442
        %484 = vmatpush1.msra.mxu0 %v441
        %485 = vmatprep.subr.mxu0 %v444
        %486 = vmatpush1.msra.mxu0 %v443
        %487 = vmatprep.subr.mxu0 0.0
        %488 = vmatpush1.msra.mxu0 0.0
        %489 = vmatprep.subr.mxu0 0.0
        %490 = vmatpush1.msra.mxu0 0.0
        %491 = vmatprep.subr.mxu0 0.0
        %492 = vmatpush1.msra.mxu0 0.0
        %493 = vmatprep.subr.mxu0 0.0
        %494 = vmatpush1.msra.mxu0 0.0
        %495 = vmatprep.subr.mxu0 0.0
        %496 = vmatpush1.msra.mxu0 0.0
        %497 = vmatprep.subr.mxu0 0.0
        %498 = vmatpush1.msra.mxu0 0.0
        %499 = vmatprep.subr.mxu0 0.0
        %500 = vmatpush1.msra.mxu0 0.0
        %501 = vmatprep.subr.mxu0 0.0
        %502 = vmatpush1.msra.mxu0 0.0
        %503 = vmatprep.subr.mxu0 0.0
        %504 = vmatpush1.msra.mxu0 0.0
        %505 = vmatprep.subr.mxu0 0.0
        %506 = vmatpush1.msra.mxu0 0.0
        %507 = vmatprep.subr.mxu0 0.0
        %508 = vmatpush1.msra.mxu0 0.0
        %509 = vmatprep.subr.mxu0 0.0
        %510 = vmatpush1.msra.mxu0 0.0
        %511 = vmatprep.subr.mxu0 0.0
        %512 = vmatpush1.msra.mxu0 0.0
        %513 = vmatprep.subr.mxu0 0.0
        %514 = vmatpush1.msra.mxu0 0.0
        %515 = vmatprep.subr.mxu0 0.0
        %516 = vmatpush1.msra.mxu0 0.0
        %517 = vmatprep.subr.mxu0 0.0
        %518 = vmatpush1.msra.mxu0 0.0
        %519 = vmatprep.mubr.f32.mxu0 0.0
        %520 = vmatmul.mubr.f32.gmra.mrb[0].mxu0 %v450
        %v521 = vpop.f32.mrb[0].mxu0
        %v522 = vadd.f32 0.0, %v521
        %v523 = vpop.f32.mrb[0].mxu0
        %v524 = vadd.f32 0.0, %v523
        %525 = vmatprep.mubr.f32.mxu0 0.0
        %526 = vmatmul.mubr.f32.gmra.mrb[0].mxu0 %v452
        %v527 = vpop.f32.mrb[0].mxu0
        %v528 = vadd.f32 0.0, %v527
        %v529 = vpop.f32.mrb[0].mxu0
        %v530 = vadd.f32 0.0, %v529
        %531 = vdwg.mxu0
        %532 = vmatprep.subr.mxu0 %v381
        %533 = vmatpush1.msra.mxu0 %v380
        %534 = vmatprep.subr.mxu0 %v383
        %535 = vmatpush1.msra.mxu0 %v382
        %536 = vmatprep.subr.mxu0 %v385
        %537 = vmatpush1.msra.mxu0 %v384
        %538 = vmatprep.subr.mxu0 %v387
        %539 = vmatpush1.msra.mxu0 %v386
        %540 = vmatprep.subr.mxu0 %v389
        %541 = vmatpush1.msra.mxu0 %v388
        %542 = vmatprep.subr.mxu0 %v391
        %543 = vmatpush1.msra.mxu0 %v390
        %544 = vmatprep.subr.mxu0 %v393
        %545 = vmatpush1.msra.mxu0 %v392
        %546 = vmatprep.subr.mxu0 %v395
        %547 = vmatpush1.msra.mxu0 %v394
        %548 = vmatprep.subr.mxu0 %v397
        %549 = vmatpush1.msra.mxu0 %v396
        %550 = vmatprep.subr.mxu0 %v399
        %551 = vmatpush1.msra.mxu0 %v398
        %552 = vmatprep.subr.mxu0 %v401
        %553 = vmatpush1.msra.mxu0 %v400
        %554 = vmatprep.subr.mxu0 %v403
        %555 = vmatpush1.msra.mxu0 %v402
        %556 = vmatprep.subr.mxu0 %v405
        %557 = vmatpush1.msra.mxu0 %v404
        %558 = vmatprep.subr.mxu0 %v407
        %559 = vmatpush1.msra.mxu0 %v406
        %560 = vmatprep.subr.mxu0 %v409
        %561 = vmatpush1.msra.mxu0 %v408
        %562 = vmatprep.subr.mxu0 %v411
        %563 = vmatpush1.msra.mxu0 %v410
        %564 = vmatprep.subr.mxu0 0.0
        %565 = vmatpush1.msra.mxu0 0.0
        %566 = vmatprep.subr.mxu0 0.0
        %567 = vmatpush1.msra.mxu0 0.0
        %568 = vmatprep.subr.mxu0 0.0
        %569 = vmatpush1.msra.mxu0 0.0
        %570 = vmatprep.subr.mxu0 0.0
        %571 = vmatpush1.msra.mxu0 0.0
        %572 = vmatprep.subr.mxu0 0.0
        %573 = vmatpush1.msra.mxu0 0.0
        %574 = vmatprep.subr.mxu0 0.0
        %575 = vmatpush1.msra.mxu0 0.0
        %576 = vmatprep.subr.mxu0 0.0
        %577 = vmatpush1.msra.mxu0 0.0
        %578 = vmatprep.subr.mxu0 0.0
        %579 = vmatpush1.msra.mxu0 0.0
        %580 = vmatprep.subr.mxu0 0.0
        %581 = vmatpush1.msra.mxu0 0.0
        %582 = vmatprep.subr.mxu0 0.0
        %583 = vmatpush1.msra.mxu0 0.0
        %584 = vmatprep.subr.mxu0 0.0
        %585 = vmatpush1.msra.mxu0 0.0
        %586 = vmatprep.subr.mxu0 0.0
        %587 = vmatpush1.msra.mxu0 0.0
        %588 = vmatprep.subr.mxu0 0.0
        %589 = vmatpush1.msra.mxu0 0.0
        %590 = vmatprep.subr.mxu0 0.0
        %591 = vmatpush1.msra.mxu0 0.0
        %592 = vmatprep.subr.mxu0 0.0
        %593 = vmatpush1.msra.mxu0 0.0
        %594 = vmatprep.subr.mxu0 0.0
        %595 = vmatpush1.msra.mxu0 0.0
        %596 = vmatprep.mubr.f32.mxu0 0.0
        %597 = vmatmul.mubr.f32.gmra.mrb[0].mxu0 %v378
        %v598 = vpop.f32.mrb[0].mxu0
        %v599 = vadd.f32 %v522, %v598
        %v600 = vpop.f32.mrb[0].mxu0
        %v601 = vadd.f32 %v524, %v600
        %602 = vmatprep.mubr.f32.mxu0 0.0
        %603 = vmatmul.mubr.f32.gmra.mrb[0].mxu0 %v374
        %v604 = vpop.f32.mrb[0].mxu0
        %v605 = vadd.f32 %v528, %v604
        %v606 = vpop.f32.mrb[0].mxu0
        %v607 = vadd.f32 %v530, %v606
        %608 = vdwg.mxu0
        %s609 = scalar_lea.vmem [#allocation5], 512
        %v610 = vld [vmem:[%s609] sm:$0xff]
        %v611 = vld [vmem:[%s609 + $0x8] sm:$0xff]
        %v612 = vld [vmem:[%s609 + $0x10] sm:$0xff]
        %v613 = vld [vmem:[%s609 + $0x18] sm:$0xff]
        %v614 = vld [vmem:[%s609 + $0x20] sm:$0xff]
        %v615 = vld [vmem:[%s609 + $0x28] sm:$0xff]
        %v616 = vld [vmem:[%s609 + $0x30] sm:$0xff]
        %v617 = vld [vmem:[%s609 + $0x38] sm:$0xff]
        %v618 = vld [vmem:[%s609 + $0x40] sm:$0xff]
        %v619 = vld [vmem:[%s609 + $0x48] sm:$0xff]
        %v620 = vld [vmem:[%s609 + $0x50] sm:$0xff]
        %v621 = vld [vmem:[%s609 + $0x58] sm:$0xff]
        %v622 = vld [vmem:[%s609 + $0x60] sm:$0xff]
        %v623 = vld [vmem:[%s609 + $0x68] sm:$0xff]
        %v624 = vld [vmem:[%s609 + $0x70] sm:$0xff]
        %v625 = vld [vmem:[%s609 + $0x78] sm:$0xff]
        %v626 = vld [vmem:[%s609 + $0x80] sm:$0xff]
        %v627 = vld [vmem:[%s609 + $0x88] sm:$0xff]
        %v628 = vld [vmem:[%s609 + $0x90] sm:$0xff]
        %v629 = vld [vmem:[%s609 + $0x98] sm:$0xff]
        %v630 = vld [vmem:[%s609 + $0xa0] sm:$0xff]
        %v631 = vld [vmem:[%s609 + $0xa8] sm:$0xff]
        %v632 = vld [vmem:[%s609 + $0xb0] sm:$0xff]
        %v633 = vld [vmem:[%s609 + $0xb8] sm:$0xff]
        %v634 = vld [vmem:[%s609 + $0xc0] sm:$0xff]
        %v635 = vld [vmem:[%s609 + $0xc8] sm:$0xff]
        %v636 = vld [vmem:[%s609 + $0xd0] sm:$0xff]
        %v637 = vld [vmem:[%s609 + $0xd8] sm:$0xff]
        %v638 = vld [vmem:[%s609 + $0xe0] sm:$0xff]
        %v639 = vld [vmem:[%s609 + $0xe8] sm:$0xff]
        %v640 = vld [vmem:[%s609 + $0xf0] sm:$0xff]
        %v641 = vld [vmem:[%s609 + $0xf8] sm:$0xff]
        %vm642 = vcmask 1045504
        %v643 = vrot.slane %v378, 2
        %v644 = vrot.slane %v374, 2
        %v645 = vsel %vm642, %v643, %v644
        %v646 = vrot.slane %v379, 2
        %v647 = vsel %vm642, %v644, %v646
        %650 = vmatprep.subr.mxu0 %v611
        %651 = vmatpush1.msra.mxu0 %v610
        %652 = vmatprep.subr.mxu0 %v613
        %653 = vmatpush1.msra.mxu0 %v612
        %654 = vmatprep.subr.mxu0 %v615
        %655 = vmatpush1.msra.mxu0 %v614
        %656 = vmatprep.subr.mxu0 %v617
        %657 = vmatpush1.msra.mxu0 %v616
        %658 = vmatprep.subr.mxu0 %v619
        %659 = vmatpush1.msra.mxu0 %v618
        %660 = vmatprep.subr.mxu0 %v621
        %661 = vmatpush1.msra.mxu0 %v620
        %662 = vmatprep.subr.mxu0 %v623
        %663 = vmatpush1.msra.mxu0 %v622
        %664 = vmatprep.subr.mxu0 %v625
        %665 = vmatpush1.msra.mxu0 %v624
        %666 = vmatprep.subr.mxu0 %v627
        %667 = vmatpush1.msra.mxu0 %v626
        %668 = vmatprep.subr.mxu0 %v629
        %669 = vmatpush1.msra.mxu0 %v628
        %670 = vmatprep.subr.mxu0 %v631
        %671 = vmatpush1.msra.mxu0 %v630
        %672 = vmatprep.subr.mxu0 %v633
        %673 = vmatpush1.msra.mxu0 %v632
        %674 = vmatprep.subr.mxu0 %v635
        %675 = vmatpush1.msra.mxu0 %v634
        %676 = vmatprep.subr.mxu0 %v637
        %677 = vmatpush1.msra.mxu0 %v636
        %678 = vmatprep.subr.mxu0 %v639
        %679 = vmatpush1.msra.mxu0 %v638
        %680 = vmatprep.subr.mxu0 %v641
        %681 = vmatpush1.msra.mxu0 %v640
        %682 = vmatprep.subr.mxu0 0.0
        %683 = vmatpush1.msra.mxu0 0.0
        %684 = vmatprep.subr.mxu0 0.0
        %685 = vmatpush1.msra.mxu0 0.0
        %686 = vmatprep.subr.mxu0 0.0
        %687 = vmatpush1.msra.mxu0 0.0
        %688 = vmatprep.subr.mxu0 0.0
        %689 = vmatpush1.msra.mxu0 0.0
        %690 = vmatprep.subr.mxu0 0.0
        %691 = vmatpush1.msra.mxu0 0.0
        %692 = vmatprep.subr.mxu0 0.0
        %693 = vmatpush1.msra.mxu0 0.0
        %694 = vmatprep.subr.mxu0 0.0
        %695 = vmatpush1.msra.mxu0 0.0
        %696 = vmatprep.subr.mxu0 0.0
        %697 = vmatpush1.msra.mxu0 0.0
        %698 = vmatprep.subr.mxu0 0.0
        %699 = vmatpush1.msra.mxu0 0.0
        %700 = vmatprep.subr.mxu0 0.0
        %701 = vmatpush1.msra.mxu0 0.0
        %702 = vmatprep.subr.mxu0 0.0
        %703 = vmatpush1.msra.mxu0 0.0
        %704 = vmatprep.subr.mxu0 0.0
        %705 = vmatpush1.msra.mxu0 0.0
        %706 = vmatprep.subr.mxu0 0.0
        %707 = vmatpush1.msra.mxu0 0.0
        %708 = vmatprep.subr.mxu0 0.0
        %709 = vmatpush1.msra.mxu0 0.0
        %710 = vmatprep.subr.mxu0 0.0
        %711 = vmatpush1.msra.mxu0 0.0
        %712 = vmatprep.subr.mxu0 0.0
        %713 = vmatpush1.msra.mxu0 0.0
        %714 = vmatprep.mubr.f32.mxu0 0.0
        %715 = vmatmul.mubr.f32.gmra.mrb[0].mxu0 %v645
        %v716 = vpop.f32.mrb[0].mxu0
        %v717 = vadd.f32 0.0, %v716
        %v718 = vpop.f32.mrb[0].mxu0
        %v719 = vadd.f32 0.0, %v718
        %720 = vmatprep.mubr.f32.mxu0 0.0
        %721 = vmatmul.mubr.f32.gmra.mrb[0].mxu0 %v647
        %v722 = vpop.f32.mrb[0].mxu0
        %v723 = vadd.f32 0.0, %v722
        %v724 = vpop.f32.mrb[0].mxu0
        %v725 = vadd.f32 0.0, %v724
        %726 = vdwg.mxu0
        %v727 = vadd.f32 %v599, %v717
        %v728 = vadd.f32 %v601, %v719
        %v729 = vadd.f32 %v605, %v723
        %v730 = vadd.f32 %v607, %v725
        %v731 = vld [vmem:[%s4] sm:$0x3]
        %v733 = vlaneseq
        %v734 = vshrl.u32 %v733, 7
        %v735 = vsub.s32 0, %v734
        %v736 = vrot.slane %v731, %v735
        %v737 = vlaneseq
        %v738 = vshrl.u32 %v737, 7
        %v739 = vsub.s32 1, %v738
        %v740 = vrot.slane %v731, %v739
        %v743 = vadd.f32 %v727, %v736
        %v744 = vadd.f32 %v728, %v740
        %v745 = vadd.f32 %v729, %v736
        %v746 = vadd.f32 %v730, %v740
        %v747 = vmax.f32 %v743, 0.0
        %v748 = vmax.f32 %v744, 0.0
        %v749 = vmax.f32 %v745, 0.0
        %v750 = vmax.f32 %v746, 0.0
        %v755 = vrot.slane %v747, 7
        %v756 = vrot.slane %v748, 7
        %v757 = vrot.slane %v749, 7
        %v758 = vsel %vm371, %v755, %v757
        %v759 = vrot.slane %v750, 7
        %v760 = vsel %vm371, %v756, %v759
        %v767 = vsel %vm371, 0.0, %v755
        %v768 = vsel %vm371, 0.0, %v756
        %v769 = vsel %vm371, %v757, 0.0
        %v770 = vsel %vm371, %v759, 0.0
        %v771 = vld [vmem:[#allocation7] sm:$0xff]
        %v772 = vld [vmem:[#allocation7 + $0x8] sm:$0xff]
        %v773 = vld [vmem:[#allocation7 + $0x10] sm:$0xff]
        %v774 = vld [vmem:[#allocation7 + $0x18] sm:$0xff]
        %v775 = vld [vmem:[#allocation7 + $0x20] sm:$0xff]
        %v776 = vld [vmem:[#allocation7 + $0x28] sm:$0xff]
        %v777 = vld [vmem:[#allocation7 + $0x30] sm:$0xff]
        %v778 = vld [vmem:[#allocation7 + $0x38] sm:$0xff]
        %v779 = vld [vmem:[#allocation7 + $0x40] sm:$0xff]
        %v780 = vld [vmem:[#allocation7 + $0x48] sm:$0xff]
        %v781 = vld [vmem:[#allocation7 + $0x50] sm:$0xff]
        %v782 = vld [vmem:[#allocation7 + $0x58] sm:$0xff]
        %v783 = vld [vmem:[#allocation7 + $0x60] sm:$0xff]
        %v784 = vld [vmem:[#allocation7 + $0x68] sm:$0xff]
        %v785 = vld [vmem:[#allocation7 + $0x70] sm:$0xff]
        %v786 = vld [vmem:[#allocation7 + $0x78] sm:$0xff]
        %v787 = vld [vmem:[#allocation7 + $0x80] sm:$0xff]
        %v788 = vld [vmem:[#allocation7 + $0x88] sm:$0xff]
        %v789 = vld [vmem:[#allocation7 + $0x90] sm:$0xff]
        %v790 = vld [vmem:[#allocation7 + $0x98] sm:$0xff]
        %v791 = vld [vmem:[#allocation7 + $0xa0] sm:$0xff]
        %v792 = vld [vmem:[#allocation7 + $0xa8] sm:$0xff]
        %v793 = vld [vmem:[#allocation7 + $0xb0] sm:$0xff]
        %v794 = vld [vmem:[#allocation7 + $0xb8] sm:$0xff]
        %v795 = vld [vmem:[#allocation7 + $0xc0] sm:$0xff]
        %v796 = vld [vmem:[#allocation7 + $0xc8] sm:$0xff]
        %v797 = vld [vmem:[#allocation7 + $0xd0] sm:$0xff]
        %v798 = vld [vmem:[#allocation7 + $0xd8] sm:$0xff]
        %v799 = vld [vmem:[#allocation7 + $0xe0] sm:$0xff]
        %v800 = vld [vmem:[#allocation7 + $0xe8] sm:$0xff]
        %v801 = vld [vmem:[#allocation7 + $0xf0] sm:$0xff]
        %v802 = vld [vmem:[#allocation7 + $0xf8] sm:$0xff]
        %s803 = scalar_lea.vmem [#allocation7], 256
        %v804 = vld [vmem:[%s803] sm:$0xff]
        %v805 = vld [vmem:[%s803 + $0x8] sm:$0xff]
        %v806 = vld [vmem:[%s803 + $0x10] sm:$0xff]
        %v807 = vld [vmem:[%s803 + $0x18] sm:$0xff]
        %v808 = vld [vmem:[%s803 + $0x20] sm:$0xff]
        %v809 = vld [vmem:[%s803 + $0x28] sm:$0xff]
        %v810 = vld [vmem:[%s803 + $0x30] sm:$0xff]
        %v811 = vld [vmem:[%s803 + $0x38] sm:$0xff]
        %v812 = vld [vmem:[%s803 + $0x40] sm:$0xff]
        %v813 = vld [vmem:[%s803 + $0x48] sm:$0xff]
        %v814 = vld [vmem:[%s803 + $0x50] sm:$0xff]
        %v815 = vld [vmem:[%s803 + $0x58] sm:$0xff]
        %v816 = vld [vmem:[%s803 + $0x60] sm:$0xff]
        %v817 = vld [vmem:[%s803 + $0x68] sm:$0xff]
        %v818 = vld [vmem:[%s803 + $0x70] sm:$0xff]
        %v819 = vld [vmem:[%s803 + $0x78] sm:$0xff]
        %v820 = vld [vmem:[%s803 + $0x80] sm:$0xff]
        %v821 = vld [vmem:[%s803 + $0x88] sm:$0xff]
        %v822 = vld [vmem:[%s803 + $0x90] sm:$0xff]
        %v823 = vld [vmem:[%s803 + $0x98] sm:$0xff]
        %v824 = vld [vmem:[%s803 + $0xa0] sm:$0xff]
        %v825 = vld [vmem:[%s803 + $0xa8] sm:$0xff]
        %v826 = vld [vmem:[%s803 + $0xb0] sm:$0xff]
        %v827 = vld [vmem:[%s803 + $0xb8] sm:$0xff]
        %v828 = vld [vmem:[%s803 + $0xc0] sm:$0xff]
        %v829 = vld [vmem:[%s803 + $0xc8] sm:$0xff]
        %v830 = vld [vmem:[%s803 + $0xd0] sm:$0xff]
        %v831 = vld [vmem:[%s803 + $0xd8] sm:$0xff]
        %v832 = vld [vmem:[%s803 + $0xe0] sm:$0xff]
        %v833 = vld [vmem:[%s803 + $0xe8] sm:$0xff]
        %v834 = vld [vmem:[%s803 + $0xf0] sm:$0xff]
        %v835 = vld [vmem:[%s803 + $0xf8] sm:$0xff]
        %v840 = vrot.slane %v767, 1
        %v841 = vrot.slane %v758, 1
        %v842 = vsel %vm447, %v840, %v841
        %v843 = vrot.slane %v768, 1
        %v844 = vrot.slane %v760, 1
        %v845 = vsel %vm447, %v843, %v844
        %v846 = vrot.slane %v769, 1
        %v847 = vsel %vm447, %v841, %v846
        %v848 = vrot.slane %v770, 1
        %v849 = vsel %vm447, %v844, %v848
        %854 = vmatprep.subr.mxu0 0.0
        %855 = vmatpush1.msra.mxu0 %v804
        %856 = vmatprep.subr.mxu0 0.0
        %857 = vmatpush1.msra.mxu0 %v805
        %858 = vmatprep.subr.mxu0 0.0
        %859 = vmatpush1.msra.mxu0 %v806
        %860 = vmatprep.subr.mxu0 0.0
        %861 = vmatpush1.msra.mxu0 %v807
        %862 = vmatprep.subr.mxu0 0.0
        %863 = vmatpush1.msra.mxu0 %v808
        %864 = vmatprep.subr.mxu0 0.0
        %865 = vmatpush1.msra.mxu0 %v809
        %866 = vmatprep.subr.mxu0 0.0
        %867 = vmatpush1.msra.mxu0 %v810
        %868 = vmatprep.subr.mxu0 0.0
        %869 = vmatpush1.msra.mxu0 %v811
        %870 = vmatprep.subr.mxu0 0.0
        %871 = vmatpush1.msra.mxu0 %v812
        %872 = vmatprep.subr.mxu0 0.0
        %873 = vmatpush1.msra.mxu0 %v813
        %874 = vmatprep.subr.mxu0 0.0
        %875 = vmatpush1.msra.mxu0 %v814
        %876 = vmatprep.subr.mxu0 0.0
        %877 = vmatpush1.msra.mxu0 %v815
        %878 = vmatprep.subr.mxu0 0.0
        %879 = vmatpush1.msra.mxu0 %v816
        %880 = vmatprep.subr.mxu0 0.0
        %881 = vmatpush1.msra.mxu0 %v817
        %882 = vmatprep.subr.mxu0 0.0
        %883 = vmatpush1.msra.mxu0 %v818
        %884 = vmatprep.subr.mxu0 0.0
        %885 = vmatpush1.msra.mxu0 %v819
        %886 = vmatprep.subr.mxu0 0.0
        %887 = vmatpush1.msra.mxu0 %v820
        %888 = vmatprep.subr.mxu0 0.0
        %889 = vmatpush1.msra.mxu0 %v821
        %890 = vmatprep.subr.mxu0 0.0
        %891 = vmatpush1.msra.mxu0 %v822
        %892 = vmatprep.subr.mxu0 0.0
        %893 = vmatpush1.msra.mxu0 %v823
        %894 = vmatprep.subr.mxu0 0.0
        %895 = vmatpush1.msra.mxu0 %v824
        %896 = vmatprep.subr.mxu0 0.0
        %897 = vmatpush1.msra.mxu0 %v825
        %898 = vmatprep.subr.mxu0 0.0
        %899 = vmatpush1.msra.mxu0 %v826
        %900 = vmatprep.subr.mxu0 0.0
        %901 = vmatpush1.msra.mxu0 %v827
        %902 = vmatprep.subr.mxu0 0.0
        %903 = vmatpush1.msra.mxu0 %v828
        %904 = vmatprep.subr.mxu0 0.0
        %905 = vmatpush1.msra.mxu0 %v829
        %906 = vmatprep.subr.mxu0 0.0
        %907 = vmatpush1.msra.mxu0 %v830
        %908 = vmatprep.subr.mxu0 0.0
        %909 = vmatpush1.msra.mxu0 %v831
        %910 = vmatprep.subr.mxu0 0.0
        %911 = vmatpush1.msra.mxu0 %v832
        %912 = vmatprep.subr.mxu0 0.0
        %913 = vmatpush1.msra.mxu0 %v833
        %914 = vmatprep.subr.mxu0 0.0
        %915 = vmatpush1.msra.mxu0 %v834
        %916 = vmatprep.subr.mxu0 0.0
        %917 = vmatpush1.msra.mxu0 %v835
        %918 = vmatprep.mubr.f32.mxu0 %v845
        %919 = vmatmul.mubr.f32.gmra.mrb[0].mxu0 %v842
        %v920 = vpop.f32.mrb[0].mxu0
        %v921 = vadd.f32 0.0, %v920
        %v922 = vpop.f32.mrb[0].mxu0
        %923 = vmatprep.mubr.f32.mxu0 %v849
        %924 = vmatmul.mubr.f32.gmra.mrb[0].mxu0 %v847
        %v925 = vpop.f32.mrb[0].mxu0
        %v926 = vadd.f32 0.0, %v925
        %v927 = vpop.f32.mrb[0].mxu0
        %928 = vdwg.mxu0
        %929 = vmatprep.subr.mxu0 0.0
        %930 = vmatpush1.msra.mxu0 %v771
        %931 = vmatprep.subr.mxu0 0.0
        %932 = vmatpush1.msra.mxu0 %v772
        %933 = vmatprep.subr.mxu0 0.0
        %934 = vmatpush1.msra.mxu0 %v773
        %935 = vmatprep.subr.mxu0 0.0
        %936 = vmatpush1.msra.mxu0 %v774
        %937 = vmatprep.subr.mxu0 0.0
        %938 = vmatpush1.msra.mxu0 %v775
        %939 = vmatprep.subr.mxu0 0.0
        %940 = vmatpush1.msra.mxu0 %v776
        %941 = vmatprep.subr.mxu0 0.0
        %942 = vmatpush1.msra.mxu0 %v777
        %943 = vmatprep.subr.mxu0 0.0
        %944 = vmatpush1.msra.mxu0 %v778
        %945 = vmatprep.subr.mxu0 0.0
        %946 = vmatpush1.msra.mxu0 %v779
        %947 = vmatprep.subr.mxu0 0.0
        %948 = vmatpush1.msra.mxu0 %v780
        %949 = vmatprep.subr.mxu0 0.0
        %950 = vmatpush1.msra.mxu0 %v781
        %951 = vmatprep.subr.mxu0 0.0
        %952 = vmatpush1.msra.mxu0 %v782
        %953 = vmatprep.subr.mxu0 0.0
        %954 = vmatpush1.msra.mxu0 %v783
        %955 = vmatprep.subr.mxu0 0.0
        %956 = vmatpush1.msra.mxu0 %v784
        %957 = vmatprep.subr.mxu0 0.0
        %958 = vmatpush1.msra.mxu0 %v785
        %959 = vmatprep.subr.mxu0 0.0
        %960 = vmatpush1.msra.mxu0 %v786
        %961 = vmatprep.subr.mxu0 0.0
        %962 = vmatpush1.msra.mxu0 %v787
        %963 = vmatprep.subr.mxu0 0.0
        %964 = vmatpush1.msra.mxu0 %v788
        %965 = vmatprep.subr.mxu0 0.0
        %966 = vmatpush1.msra.mxu0 %v789
        %967 = vmatprep.subr.mxu0 0.0
        %968 = vmatpush1.msra.mxu0 %v790
        %969 = vmatprep.subr.mxu0 0.0
        %970 = vmatpush1.msra.mxu0 %v791
        %971 = vmatprep.subr.mxu0 0.0
        %972 = vmatpush1.msra.mxu0 %v792
        %973 = vmatprep.subr.mxu0 0.0
        %974 = vmatpush1.msra.mxu0 %v793
        %975 = vmatprep.subr.mxu0 0.0
        %976 = vmatpush1.msra.mxu0 %v794
        %977 = vmatprep.subr.mxu0 0.0
        %978 = vmatpush1.msra.mxu0 %v795
        %979 = vmatprep.subr.mxu0 0.0
        %980 = vmatpush1.msra.mxu0 %v796
        %981 = vmatprep.subr.mxu0 0.0
        %982 = vmatpush1.msra.mxu0 %v797
        %983 = vmatprep.subr.mxu0 0.0
        %984 = vmatpush1.msra.mxu0 %v798
        %985 = vmatprep.subr.mxu0 0.0
        %986 = vmatpush1.msra.mxu0 %v799
        %987 = vmatprep.subr.mxu0 0.0
        %988 = vmatpush1.msra.mxu0 %v800
        %989 = vmatprep.subr.mxu0 0.0
        %990 = vmatpush1.msra.mxu0 %v801
        %991 = vmatprep.subr.mxu0 0.0
        %992 = vmatpush1.msra.mxu0 %v802
        %993 = vmatprep.mubr.f32.mxu0 %v768
        %994 = vmatmul.mubr.f32.gmra.mrb[0].mxu0 %v767
        %v995 = vpop.f32.mrb[0].mxu0
        %v996 = vadd.f32 %v921, %v995
        %v997 = vpop.f32.mrb[0].mxu0
        %998 = vmatprep.mubr.f32.mxu0 %v760
        %999 = vmatmul.mubr.f32.gmra.mrb[0].mxu0 %v758
        %v1000 = vpop.f32.mrb[0].mxu0
        %v1001 = vadd.f32 %v926, %v1000
        %v1002 = vpop.f32.mrb[0].mxu0
        %1003 = vdwg.mxu0
        %s1004 = scalar_lea.vmem [#allocation7], 512
        %v1005 = vld [vmem:[%s1004] sm:$0xff]
        %v1006 = vld [vmem:[%s1004 + $0x8] sm:$0xff]
        %v1007 = vld [vmem:[%s1004 + $0x10] sm:$0xff]
        %v1008 = vld [vmem:[%s1004 + $0x18] sm:$0xff]
        %v1009 = vld [vmem:[%s1004 + $0x20] sm:$0xff]
        %v1010 = vld [vmem:[%s1004 + $0x28] sm:$0xff]
        %v1011 = vld [vmem:[%s1004 + $0x30] sm:$0xff]
        %v1012 = vld [vmem:[%s1004 + $0x38] sm:$0xff]
        %v1013 = vld [vmem:[%s1004 + $0x40] sm:$0xff]
        %v1014 = vld [vmem:[%s1004 + $0x48] sm:$0xff]
        %v1015 = vld [vmem:[%s1004 + $0x50] sm:$0xff]
        %v1016 = vld [vmem:[%s1004 + $0x58] sm:$0xff]
        %v1017 = vld [vmem:[%s1004 + $0x60] sm:$0xff]
        %v1018 = vld [vmem:[%s1004 + $0x68] sm:$0xff]
        %v1019 = vld [vmem:[%s1004 + $0x70] sm:$0xff]
        %v1020 = vld [vmem:[%s1004 + $0x78] sm:$0xff]
        %v1021 = vld [vmem:[%s1004 + $0x80] sm:$0xff]
        %v1022 = vld [vmem:[%s1004 + $0x88] sm:$0xff]
        %v1023 = vld [vmem:[%s1004 + $0x90] sm:$0xff]
        %v1024 = vld [vmem:[%s1004 + $0x98] sm:$0xff]
        %v1025 = vld [vmem:[%s1004 + $0xa0] sm:$0xff]
        %v1026 = vld [vmem:[%s1004 + $0xa8] sm:$0xff]
        %v1027 = vld [vmem:[%s1004 + $0xb0] sm:$0xff]
        %v1028 = vld [vmem:[%s1004 + $0xb8] sm:$0xff]
        %v1029 = vld [vmem:[%s1004 + $0xc0] sm:$0xff]
        %v1030 = vld [vmem:[%s1004 + $0xc8] sm:$0xff]
        %v1031 = vld [vmem:[%s1004 + $0xd0] sm:$0xff]
        %v1032 = vld [vmem:[%s1004 + $0xd8] sm:$0xff]
        %v1033 = vld [vmem:[%s1004 + $0xe0] sm:$0xff]
        %v1034 = vld [vmem:[%s1004 + $0xe8] sm:$0xff]
        %v1035 = vld [vmem:[%s1004 + $0xf0] sm:$0xff]
        %v1036 = vld [vmem:[%s1004 + $0xf8] sm:$0xff]
        %v1037 = vrot.slane %v767, 2
        %v1038 = vrot.slane %v758, 2
        %v1039 = vsel %vm642, %v1037, %v1038
        %v1040 = vrot.slane %v768, 2
        %v1041 = vrot.slane %v760, 2
        %v1042 = vsel %vm642, %v1040, %v1041
        %v1043 = vrot.slane %v769, 2
        %v1044 = vsel %vm642, %v1038, %v1043
        %v1045 = vrot.slane %v770, 2
        %v1046 = vsel %vm642, %v1041, %v1045
        %1051 = vmatprep.subr.mxu0 0.0
        %1052 = vmatpush1.msra.mxu0 %v1005
        %1053 = vmatprep.subr.mxu0 0.0
        %1054 = vmatpush1.msra.mxu0 %v1006
        %1055 = vmatprep.subr.mxu0 0.0
        %1056 = vmatpush1.msra.mxu0 %v1007
        %1057 = vmatprep.subr.mxu0 0.0
        %1058 = vmatpush1.msra.mxu0 %v1008
        %1059 = vmatprep.subr.mxu0 0.0
        %1060 = vmatpush1.msra.mxu0 %v1009
        %1061 = vmatprep.subr.mxu0 0.0
        %1062 = vmatpush1.msra.mxu0 %v1010
        %1063 = vmatprep.subr.mxu0 0.0
        %1064 = vmatpush1.msra.mxu0 %v1011
        %1065 = vmatprep.subr.mxu0 0.0
        %1066 = vmatpush1.msra.mxu0 %v1012
        %1067 = vmatprep.subr.mxu0 0.0
        %1068 = vmatpush1.msra.mxu0 %v1013
        %1069 = vmatprep.subr.mxu0 0.0
        %1070 = vmatpush1.msra.mxu0 %v1014
        %1071 = vmatprep.subr.mxu0 0.0
        %1072 = vmatpush1.msra.mxu0 %v1015
        %1073 = vmatprep.subr.mxu0 0.0
        %1074 = vmatpush1.msra.mxu0 %v1016
        %1075 = vmatprep.subr.mxu0 0.0
        %1076 = vmatpush1.msra.mxu0 %v1017
        %1077 = vmatprep.subr.mxu0 0.0
        %1078 = vmatpush1.msra.mxu0 %v1018
        %1079 = vmatprep.subr.mxu0 0.0
        %1080 = vmatpush1.msra.mxu0 %v1019
        %1081 = vmatprep.subr.mxu0 0.0
        %1082 = vmatpush1.msra.mxu0 %v1020
        %1083 = vmatprep.subr.mxu0 0.0
        %1084 = vmatpush1.msra.mxu0 %v1021
        %1085 = vmatprep.subr.mxu0 0.0
        %1086 = vmatpush1.msra.mxu0 %v1022
        %1087 = vmatprep.subr.mxu0 0.0
        %1088 = vmatpush1.msra.mxu0 %v1023
        %1089 = vmatprep.subr.mxu0 0.0
        %1090 = vmatpush1.msra.mxu0 %v1024
        %1091 = vmatprep.subr.mxu0 0.0
        %1092 = vmatpush1.msra.mxu0 %v1025
        %1093 = vmatprep.subr.mxu0 0.0
        %1094 = vmatpush1.msra.mxu0 %v1026
        %1095 = vmatprep.subr.mxu0 0.0
        %1096 = vmatpush1.msra.mxu0 %v1027
        %1097 = vmatprep.subr.mxu0 0.0
        %1098 = vmatpush1.msra.mxu0 %v1028
        %1099 = vmatprep.subr.mxu0 0.0
        %1100 = vmatpush1.msra.mxu0 %v1029
        %1101 = vmatprep.subr.mxu0 0.0
        %1102 = vmatpush1.msra.mxu0 %v1030
        %1103 = vmatprep.subr.mxu0 0.0
        %1104 = vmatpush1.msra.mxu0 %v1031
        %1105 = vmatprep.subr.mxu0 0.0
        %1106 = vmatpush1.msra.mxu0 %v1032
        %1107 = vmatprep.subr.mxu0 0.0
        %1108 = vmatpush1.msra.mxu0 %v1033
        %1109 = vmatprep.subr.mxu0 0.0
        %1110 = vmatpush1.msra.mxu0 %v1034
        %1111 = vmatprep.subr.mxu0 0.0
        %1112 = vmatpush1.msra.mxu0 %v1035
        %1113 = vmatprep.subr.mxu0 0.0
        %1114 = vmatpush1.msra.mxu0 %v1036
        %1115 = vmatprep.mubr.f32.mxu0 %v1042
        %1116 = vmatmul.mubr.f32.gmra.mrb[0].mxu0 %v1039
        %v1117 = vpop.f32.mrb[0].mxu0
        %v1118 = vadd.f32 0.0, %v1117
        %v1119 = vpop.f32.mrb[0].mxu0
        %1120 = vmatprep.mubr.f32.mxu0 %v1046
        %1121 = vmatmul.mubr.f32.gmra.mrb[0].mxu0 %v1044
        %v1122 = vpop.f32.mrb[0].mxu0
        %v1123 = vadd.f32 0.0, %v1122
        %v1124 = vpop.f32.mrb[0].mxu0
        %1125 = vdwg.mxu0
        %v1126 = vadd.f32 %v996, %v1118
        %v1127 = vadd.f32 %v1001, %v1123
        %v1128 = vld [vmem:[%s6] sm:$0x1]
        %v1130 = vlaneseq
        %v1131 = vshrl.u32 %v1130, 7
        %v1132 = vsub.s32 0, %v1131
        %v1133 = vrot.slane %v1128, %v1132
        %v1135 = vadd.f32 %v1126, %v1133
        %v1136 = vadd.f32 %v1127, %v1133
        %v1137 = vadd.f32 %v1135, %v326
        %v1138 = vadd.f32 %v1136, %v327
        %1139 = vst [vmem:[%s325] sm:$0xff] %v1137
        %1140 = vst [vmem:[%s325 + $0x8] sm:$0xff] %v1138
        %s1141 = sand.u32 %s185, 1
        %s1142 = scalar_lea.sflag [#allocation4], %s1141
        %s1143 = sand.u32 %s185, 1
        %s1144 = smul.addr %s1143, 16
        %s1145 = scalar_lea.vmem [#allocation8], %s1144
        // Predicated region
        $region61: #{tpu_custom_call.1} parent=47 // pred_check
          %p1146 = pneg %p195
        $region62: #{tpu_custom_call.1} parent=47 // pred_check_branch
          %1148 = sbr.rel (%p1146) target = $region64
        $region63: #{tpu_custom_call.1} parent=47 // pred_region
          %s1150 = ssub.s32 256, 256
          %1151 = vsyncadd %s1142, %s1150
          %s1152 = smul.addr %s25, 2
          %s1153 = smul.addr %s1152, 128
          %s1154 = scalar_lea.hbm %s7, %s1153
          %s1155 = sshll.u32 %s1145, 4
          %s1156 = int_to_ptr.vmem [resolvable:$true] %s1155
          %1161 = dma.vmem_to_hbm [thread:$0]  %s1156, 256, %s1154, %s1142, 128, 128, 8
        $region64: #{tpu_custom_call.1} parent=47 // pred_fallthru
          _
      $region48: #{tpu_custom_call.1} parent=5 // pred_fallthru
        _
      %p1162 = scmp.le.s32.totalorder 2, %s20
      // Predicated region
      $region65: #{tpu_custom_call.1} parent=5 // pred_check
        %p1163 = pneg %p1162
      $region66: #{tpu_custom_call.1} parent=5 // pred_check_branch
        %1165 = sbr.rel (%p1163) target = $region68
      $region67: #{tpu_custom_call.1} parent=5 // pred_region
        %s1166 = ssub.s32 %s20, 2
        // Predicated region
        $region69: #{tpu_custom_call.1} parent=67 // pred_check
          %p1167 = pneg %p201
        $region70: #{tpu_custom_call.1} parent=67 // pred_check_branch
          %1169 = sbr.rel (%p1167) target = $region72
        $region71: #{tpu_custom_call.1} parent=67 // pred_region
          %s1170 = sand.u32 %s186, 1
          %s1171 = scalar_lea.sflag [#allocation4], %s1170
          %s1172 = sand.u32 %s186, 1
          %s1173 = smul.addr %s1172, 16
          %s1174 = scalar_lea.vmem [#allocation8], %s1173
          %1175 = dma.done %s1171, 256
        $region72: #{tpu_custom_call.1} parent=67 // pred_fallthru
          _
      $region68: #{tpu_custom_call.1} parent=5 // pred_fallthru
        _
    $region6: #{tpu_custom_call.1} parent=1 // loop_footer
      %s24 = sadd.s32 1, %s20
    $region7: #{tpu_custom_call.1} parent=1 // loop_footer_branch
      %19 = sbr.rel target = $region3
    $region8: #{tpu_custom_call.1} parent=1 // loop_exit
      _
    %1176 = vsyncpa [#allocation3], 1
    %s1177 = scalar_lea.sflag [#allocation3], 1
    %1178 = vsyncpa %s1177, 1
    %1179 = vsyncpa [#allocation6], 1
    %1180 = vsyncpa [#allocation4], 1
    %s1181 = scalar_lea.sflag [#allocation4], 1
    %1182 = vsyncpa %s1181, 1

</llo_original>
